<compile_context>
chip_gen: v7x
topology: tpu7x:2x2x1
jax: 0.10.0
libtpu: 0.0.40
codegen_flags: <defaults>
</compile_context>

<pallas_src>
import jax
import jax.numpy as jnp
import numpy as np
from jax import lax
from jax.experimental import pallas as pl
from jax.experimental.pallas import tpu as pltpu


# --------------------------------------------------------------------------- #
# helpers
# --------------------------------------------------------------------------- #

def _vmem_limit_bytes():
    """Scoped-VMEM limit derived from the actual part instead of a hard-coded
    constant: ~48 MiB on a 64 MiB part (v7x), 64 MiB on the 128 MiB parts
    (v5e / v6e).  Conservative fallback if the query is unavailable."""
    try:
        cap = int(pltpu.get_tpu_info().vmem_capacity_bytes)
    except Exception:
        cap = 0
    if cap <= 0:
        cap = 64 * 1024 * 1024
    return int(min(3 * cap // 4, 64 * 1024 * 1024))


def _maybe_single_buffered(block_shape, index_map):
    """BlockSpec asking Pallas for a single (non-double-buffered) VMEM buffer.
    Used for inputs whose block index is constant over the inner grid axes so
    the second buffer is pure VMEM waste.  Falls back to a plain BlockSpec if
    this Pallas build has no pipeline_mode."""
    try:
        return pl.BlockSpec(block_shape, index_map, pipeline_mode=pl.Buffered(1))
    except Exception:
        return pl.BlockSpec(block_shape, index_map)


def _tile_candidates(n, prefer_divisors, cap):
    """Descending tile sizes for an axis of length n: the full extent first,
    then multiples of 128 (BlockSpec (8, 128) rule), optionally divisors only
    (avoids masked edge tiles)."""
    out = [n]
    t = (min(n, cap) // 128) * 128
    while t >= 128:
        if t < n and ((not prefer_divisors) or n % t == 0):
            out.append(t)
        t -= 128
    return out


def _pick_seq_tile(n, d, m, in_bytes, inter_bytes, budget):
    """Stage-1 Q/K row tile TQ: VMEM use is bounded independently of N."""
    def cost(tq):
        return (4 * tq * d * in_bytes        # Q + K tiles, double-buffered
                + 4 * m * d * in_bytes       # landmark blocks, double-buffered
                + 2 * m * tq * inter_bytes   # k1t out tile, double-buffered
                + 2 * m * tq * 4)            # raw-score out tile (f32)
    for prefer in (True, False):
        for tq in _tile_candidates(n, prefer, 4096):
            if cost(tq) <= budget:
                return tq
    return 128


def _pick_out_tiles(n, m, inter_bytes, budget):
    """Stage-2 output tile (TN, TC).  Prefer a full-width lane-dense column
    (TC == N); tile the column axis only when even TN = 128 would not fit.
    Unlike the previous picker, this one can never exceed its own budget."""
    def cost(tn, tc):
        return (2 * tn * tc * 4              # f32 out tile, double-buffered
                + 2 * m * tn * inter_bytes   # k1t tile, double-buffered
                + 2 * m * tc * inter_bytes   # k3 tile (counted at 2 buffers)
                + 2 * m * m * 4)             # pinv(k2)
    for prefer in (True, False):
        for tc in _tile_candidates(n, prefer, 32768):
            for tn in _tile_candidates(n, prefer, 2048):
                if cost(tn, tc) <= budget:
                    return tn, tc
    return 128, 128


# --------------------------------------------------------------------------- #
# kernels
# --------------------------------------------------------------------------- #

def _stage1_kernel(q_ref, k_ref, qt_ref, kt_ref, k1t_ref, s3_ref):
    """One (batch, sequence-tile) step of the landmark kernels.

    q (TQ, D), k (TQ, D), qt (m, D), kt (m, D)  ->
      k1t tile (m, TQ): softmax(Q Kt^T, axis=-1)^T restricted to this tile's
        columns (the softmax runs over the local m axis, so it is exact per
        column tile); stored transposed => lane-dense HBM stores.
      s3 tile (m, TQ): raw Qt K^T scores (f32).  kernel3's softmax spans the
        tiled N axis, so normalisation happens once, in the glue.
    """
    dn = (((1,), (1,)), ((), ()))   # contract the head_dim axis: A @ B^T
    s1t = lax.dot_general(kt_ref[...], q_ref[...], dn,
                          preferred_element_type=jnp.float32)      # (m, TQ)
    mx = jnp.max(s1t, axis=0, keepdims=True)
    e = jnp.exp(s1t - mx)
    k1t_ref[...] = (e / jnp.sum(e, axis=0, keepdims=True)).astype(k1t_ref.dtype)
    s3_ref[...] = lax.dot_general(qt_ref[...], k_ref[...], dn,
                                  preferred_element_type=jnp.float32)


def _stage2_kernel(k1t_ref, v_ref, k3_ref, out_ref):
    """att[b, i*TN:(i+1)*TN, j*TC:(j+1)*TC] = (k1_tile @ V) @ k3_cols.

    k1 arrives transposed as (m, TN), so the leading landmark axis is
    contracted directly (no in-kernel transpose).  The tiny (TN, m) @ (m, m)
    product is recomputed per column tile; that is negligible next to the HBM
    writeback this kernel is bound by.  V stays f32 for accuracy; the product
    is cast to k3's dtype for the MXU's native path.
    """
    dn = (((0,), (0,)), ((), ()))   # contract the landmark axis
    tmp = lax.dot_general(k1t_ref[...].astype(jnp.float32), v_ref[...], dn,
                          preferred_element_type=jnp.float32)      # (TN, m)
    out_ref[...] = jnp.dot(tmp.astype(k3_ref.dtype), k3_ref[...],
                           preferred_element_type=jnp.float32).astype(out_ref.dtype)


# --------------------------------------------------------------------------- #
# wrapper
# --------------------------------------------------------------------------- #

@jax.jit
def nystrom_attention_pallas(Q, K, Q_tilde, K_tilde):
    f32 = jnp.float32
    B, N, D = Q.shape
    m = Q_tilde.shape[1]

    # Feed the MXU in the input's own dtype (no forced f32 copy of Q/K; halves
    # the stage-1 read when callers pass bf16).  Anything non-native -> f32.
    in_dtype = Q.dtype if Q.dtype in (jnp.bfloat16, jnp.float32) else f32
    Q, K = Q.astype(in_dtype), K.astype(in_dtype)
    Q_tilde, K_tilde = Q_tilde.astype(in_dtype), K_tilde.astype(in_dtype)

    # bf16 inter-stage tensors only pay off when m >= 16 (bf16 sublane tile is
    # (16, 128); below that the padding cancels the bandwidth saving while
    # still losing precision).
    inter_dtype = jnp.bfloat16 if m >= 16 else f32
    in_bytes = np.dtype(in_dtype).itemsize
    inter_bytes = np.dtype(inter_dtype).itemsize

    vmem_limit = _vmem_limit_bytes()
    budget = (4 * vmem_limit) // 5          # headroom for Mosaic internals

    # ---- stage 1: landmark matmuls, tiled over the sequence ----------------
    TQ = _pick_seq_tile(N, D, m, in_bytes, inter_bytes, budget)
    k1t, s3 = pl.pallas_call(
        _stage1_kernel,
        out_shape=(
            jax.ShapeDtypeStruct((B, m, N), inter_dtype),  # kernel1^T, lane-dense
            jax.ShapeDtypeStruct((B, m, N), f32),          # raw Qt K^T scores
        ),
        grid=(B, pl.cdiv(N, TQ)),
        in_specs=[
            pl.BlockSpec((None, TQ, D), lambda b, i: (b, i, 0)),
            pl.BlockSpec((None, TQ, D), lambda b, i: (b, i, 0)),
            pl.BlockSpec((None, m, D), lambda b, i: (b, 0, 0)),
            pl.BlockSpec((None, m, D), lambda b, i: (b, 0, 0)),
        ],
        out_specs=(
            pl.BlockSpec((None, m, TQ), lambda b, i: (b, 0, i)),
            pl.BlockSpec((None, m, TQ), lambda b, i: (b, 0, i)),
        ),
        compiler_params=pltpu.CompilerParams(
            dimension_semantics=("parallel", "parallel"),
            vmem_limit_bytes=vmem_limit),
    )(Q, K, Q_tilde, K_tilde)

    # ---- glue: tiny XLA work, hoisted out of both Pallas hot paths ---------
    # kernel2 is only (m, m); computing it here (rather than under a
    # pl.when(i == 0) inside stage 1) keeps both stage-1 grid axes "parallel",
    # which is what lets v7x's two TensorCores split the N-tile axis safely.
    qt32, kt32 = Q_tilde.astype(f32), K_tilde.astype(f32)
    k2 = jax.nn.softmax(jnp.einsum('bld,bmd->blm', qt32, kt32), axis=-1)
    # kernel3: softmax over the full (previously tiled) N axis, applied once.
    k3 = jax.nn.softmax(s3, axis=-1).astype(inter_dtype)
    # torch.max(torch.sum(K, dim=-2)) is a *global* (whole-batch) scalar.
    scale = 1.0 / jnp.max(jnp.sum(k2, axis=-2))
    I = jnp.eye(m, dtype=f32)
    V = scale * jnp.swapaxes(k2, -1, -2)
    for _ in range(6):                      # Newton-Schulz pseudo-inverse, f32
        KV = k2 @ V
        V = (0.25 * V) @ (13.0 * I - KV @ (15.0 * I - KV @ (7.0 * I - KV)))
    # NOTE: W = V @ k3 is intentionally NOT materialized; stage 2 computes
    # (k1_tile @ V) @ k3 directly, removing a (B, m, N) HBM write + read, and
    # V stays f32 so the pinv is rounded at most once on the way to att.

    # ---- stage 2: att output tiles (HBM-store-bound) ------------------------
    TN, TC = _pick_out_tiles(N, m, inter_bytes, budget)
    grid2 = (B, pl.cdiv(N, TN), pl.cdiv(N, TC))
    single_col = grid2[2] == 1
    k3_spec = (_maybe_single_buffered if single_col else pl.BlockSpec)(
        (None, m, TC), lambda b, i, j: (b, 0, j))
    try:
        cost = pl.CostEstimate(
            flops=2 * B * N * N * m + 2 * B * N * m * m,
            transcendentals=0,
            bytes_accessed=B * N * N * 4 + 2 * B * m * N * inter_bytes + B * m * m * 4)
    except Exception:
        cost = None
    att = pl.pallas_call(
        _stage2_kernel,
        out_shape=jax.ShapeDtypeStruct((B, N, N), f32),
        grid=grid2,
        in_specs=[
            pl.BlockSpec((None, m, TN), lambda b, i, j: (b, 0, i)),
            _maybe_single_buffered((None, m, m), lambda b, i, j: (b, 0, 0)),
            k3_spec,
        ],
        out_specs=pl.BlockSpec((None, TN, TC), lambda b, i, j: (b, i, j)),
        compiler_params=pltpu.CompilerParams(
            dimension_semantics=("parallel", "parallel", "parallel"),
            vmem_limit_bytes=vmem_limit),
        cost_estimate=cost,
    )(k1t, V, k3)
    # TODO(synk): emitting att in bf16 (or fusing the downstream att @ values
    # matmul into stage 2) would halve / remove the dominant HBM writeback,
    # but it changes the module's output contract, so att stays f32 here.
    return att


# --------------------------------------------------------------------------- #
# reference + self-test
# --------------------------------------------------------------------------- #

def nystrom_reference(Q, K, Q_tilde, K_tilde):
    # pure-JAX reference mirroring the PyTorch forward exactly (all f32)
    k1 = jax.nn.softmax(jnp.einsum('bnd,bmd->bnm', Q, K_tilde), axis=-1)
    k2 = jax.nn.softmax(jnp.einsum('bld,bmd->blm', Q_tilde, K_tilde), axis=-1)
    k3 = jax.nn.softmax(jnp.einsum('bld,bnd->bln', Q_tilde, K), axis=-1)
    I = jnp.eye(k2.shape[-1], dtype=jnp.float32)
    V = (1.0 / jnp.max(jnp.sum(k2, axis=-2))) * jnp.swapaxes(k2, -1, -2)
    for _ in range(6):
        KV = k2 @ V
        V = (0.25 * V) @ (13.0 * I - KV @ (15.0 * I - KV @ (7.0 * I - KV)))
    return k1 @ V @ k3


if __name__ == "__main__":
    B, N, D, m = 2, 64, 32, 8  # batch, seq_len, head_dim, num_landmarks

    key = jax.random.PRNGKey(0)
    kq, kk, kp1, kp2 = jax.random.split(key, 4)
    # Queries/keys at the usual attention scale (std ~ 1/sqrt(head_dim)); keeps
    # the landmark Gram matrix well conditioned, as in real workloads.
    Q = jax.random.normal(kq, (B, N, D), dtype=jnp.float32) * (D ** -0.5)
    K = jax.random.normal(kk, (B, N, D), dtype=jnp.float32) * (D ** -0.5)

    # torch.randperm landmark selection, done deterministically with PRNGKey(0)
    idx_q = jax.random.permutation(kp1, N)[:m]
    idx_k = jax.random.permutation(kp2, N)[:m]
    Q_tilde = Q[:, idx_q, :]
    K_tilde = K[:, idx_k, :]

    att = nystrom_attention_pallas(Q, K, Q_tilde, K_tilde)
    att = jax.block_until_ready(att)

    ref = nystrom_reference(Q, K, Q_tilde, K_tilde)
    assert att.shape == (B, N, N)
    # m = 8 < 16 -> the inter-stage tensors stay f32 (bf16 would only pad),
    # so the kernel tracks the f32 reference tightly.
    np.testing.assert_allclose(np.asarray(att), np.asarray(ref),
                               rtol=5e-3, atol=5e-3)
    print("KERNEL_OK")
</pallas_src>

<mosaic_0001>
module attributes {stable_mosaic.version = 11 : i64} {
  func.func @_stage1_kernel(%arg0: i32, %arg1: i32, %arg2: memref<1x64x32xf32, #tpu.memory_space<vmem>>, %arg3: memref<1x64x32xf32, #tpu.memory_space<vmem>>, %arg4: memref<1x8x32xf32, #tpu.memory_space<vmem>>, %arg5: memref<1x8x32xf32, #tpu.memory_space<vmem>>, %arg6: memref<1x8x64xf32, #tpu.memory_space<vmem>>, %arg7: memref<1x8x64xf32, #tpu.memory_space<vmem>>) attributes {dimension_semantics = [#tpu.dimension_semantics<parallel>, #tpu.dimension_semantics<parallel>], iteration_bounds = array<i64: 2, 1>, scalar_prefetch = 0 : i64, scratch_operands = 0 : i64, tpu.core_type = #tpu.core_type<tc>, window_params = [{transform_indices = @transform_0, window_bounds = array<i64: 1, 64, 32>}, {transform_indices = @transform_1, window_bounds = array<i64: 1, 64, 32>}, {transform_indices = @transform_2, window_bounds = array<i64: 1, 8, 32>}, {transform_indices = @transform_3, window_bounds = array<i64: 1, 8, 32>}, {transform_indices = @transform_4, window_bounds = array<i64: 1, 8, 64>}, {transform_indices = @transform_5, window_bounds = array<i64: 1, 8, 64>}]} {
    %c0 = arith.constant 0 : index
    %c0_0 = arith.constant 0 : index
    %c0_1 = arith.constant 0 : index
    %0 = vector.load %arg5[%c0, %c0_0, %c0_1] : memref<1x8x32xf32, #tpu.memory_space<vmem>>, vector<1x8x32xf32>
    %1 = vector.shape_cast %0 : vector<1x8x32xf32> to vector<8x32xf32>
    %c0_2 = arith.constant 0 : index
    %c0_3 = arith.constant 0 : index
    %c0_4 = arith.constant 0 : index
    %2 = vector.load %arg2[%c0_2, %c0_3, %c0_4] : memref<1x64x32xf32, #tpu.memory_space<vmem>>, vector<1x64x32xf32>
    %3 = vector.shape_cast %2 : vector<1x64x32xf32> to vector<64x32xf32>
    %cst = arith.constant dense<0.000000e+00> : vector<8x64xf32>
    %4 = tpu.matmul %1, %3, %cst {dimension_numbers = #tpu.dot_dimension_numbers<[1], [1], [0], [0], [0, 0, 1, 0], [], []>} : vector<8x32xf32>, vector<64x32xf32>, vector<8x64xf32> -> vector<8x64xf32>
    %cst_5 = arith.constant dense<0xFF800000> : vector<64xf32>
    %5 = vector.multi_reduction <maximumf>, %4, %cst_5 [0] : vector<8x64xf32> to vector<64xf32>
    %6 = vector.shape_cast %5 : vector<64xf32> to vector<1x64xf32>
    %7 = vector.broadcast %6 : vector<1x64xf32> to vector<8x64xf32>
    %8 = arith.subf %4, %7 : vector<8x64xf32>
    %9 = math.exp %8 : vector<8x64xf32>
    %cst_6 = arith.constant dense<0.000000e+00> : vector<64xf32>
    %10 = vector.multi_reduction <add>, %9, %cst_6 [0] : vector<8x64xf32> to vector<64xf32>
    %11 = vector.shape_cast %10 : vector<64xf32> to vector<1x64xf32>
    %12 = vector.broadcast %11 : vector<1x64xf32> to vector<8x64xf32>
    %13 = arith.divf %9, %12 : vector<8x64xf32>
    %c0_7 = arith.constant 0 : index
    %c0_8 = arith.constant 0 : index
    %c0_9 = arith.constant 0 : index
    %14 = vector.load %arg6[%c0_7, %c0_8, %c0_9] : memref<1x8x64xf32, #tpu.memory_space<vmem>>, vector<1x8x64xf32>
    %15 = vector.shape_cast %14 : vector<1x8x64xf32> to vector<8x64xf32>
    %16 = vector.shape_cast %13 : vector<8x64xf32> to vector<1x8x64xf32>
    tpu.vector_store %arg6[%c0_7, %c0_8, %c0_9], %16 {strides = array<i32>} : memref<1x8x64xf32, #tpu.memory_space<vmem>>, vector<1x8x64xf32>,
    %c0_10 = arith.constant 0 : index
    %c0_11 = arith.constant 0 : index
    %c0_12 = arith.constant 0 : index
    %17 = vector.load %arg4[%c0_10, %c0_11, %c0_12] : memref<1x8x32xf32, #tpu.memory_space<vmem>>, vector<1x8x32xf32>
    %18 = vector.shape_cast %17 : vector<1x8x32xf32> to vector<8x32xf32>
    %c0_13 = arith.constant 0 : index
    %c0_14 = arith.constant 0 : index
    %c0_15 = arith.constant 0 : index
    %19 = vector.load %arg3[%c0_13, %c0_14, %c0_15] : memref<1x64x32xf32, #tpu.memory_space<vmem>>, vector<1x64x32xf32>
    %20 = vector.shape_cast %19 : vector<1x64x32xf32> to vector<64x32xf32>
    %cst_16 = arith.constant dense<0.000000e+00> : vector<8x64xf32>
    %21 = tpu.matmul %18, %20, %cst_16 {dimension_numbers = #tpu.dot_dimension_numbers<[1], [1], [0], [0], [0, 0, 1, 0], [], []>} : vector<8x32xf32>, vector<64x32xf32>, vector<8x64xf32> -> vector<8x64xf32>
    %c0_17 = arith.constant 0 : index
    %c0_18 = arith.constant 0 : index
    %c0_19 = arith.constant 0 : index
    %22 = vector.load %arg7[%c0_17, %c0_18, %c0_19] : memref<1x8x64xf32, #tpu.memory_space<vmem>>, vector<1x8x64xf32>
    %23 = vector.shape_cast %22 : vector<1x8x64xf32> to vector<8x64xf32>
    %24 = vector.shape_cast %21 : vector<8x64xf32> to vector<1x8x64xf32>
    tpu.vector_store %arg7[%c0_17, %c0_18, %c0_19], %24 {strides = array<i32>} : memref<1x8x64xf32, #tpu.memory_space<vmem>>, vector<1x8x64xf32>,
    return
  }
  func.func @transform_0(%arg0: i32, %arg1: i32) -> (i32, i32, i32) {
    %c0_i32 = arith.constant 0 : i32
    %c0_i32_0 = arith.constant 0 : i32
    return %arg0, %arg1, %c0_i32 : i32, i32, i32
  }
  func.func @transform_1(%arg0: i32, %arg1: i32) -> (i32, i32, i32) {
    %c0_i32 = arith.constant 0 : i32
    %c0_i32_0 = arith.constant 0 : i32
    return %arg0, %arg1, %c0_i32 : i32, i32, i32
  }
  func.func @transform_2(%arg0: i32, %arg1: i32) -> (i32, i32, i32) {
    %c0_i32 = arith.constant 0 : i32
    %c0_i32_0 = arith.constant 0 : i32
    %c0_i32_1 = arith.constant 0 : i32
    return %arg0, %c0_i32, %c0_i32_0 : i32, i32, i32
  }
  func.func @transform_3(%arg0: i32, %arg1: i32) -> (i32, i32, i32) {
    %c0_i32 = arith.constant 0 : i32
    %c0_i32_0 = arith.constant 0 : i32
    %c0_i32_1 = arith.constant 0 : i32
    return %arg0, %c0_i32, %c0_i32_0 : i32, i32, i32
  }
  func.func @transform_4(%arg0: i32, %arg1: i32) -> (i32, i32, i32) {
    %c0_i32 = arith.constant 0 : i32
    %c0_i32_0 = arith.constant 0 : i32
    return %arg0, %c0_i32, %arg1 : i32, i32, i32
  }
  func.func @transform_5(%arg0: i32, %arg1: i32) -> (i32, i32, i32) {
    %c0_i32 = arith.constant 0 : i32
    %c0_i32_0 = arith.constant 0 : i32
    return %arg0, %c0_i32, %arg1 : i32, i32, i32
  }
}

module attributes {stable_mosaic.version = 11 : i64} {
  func.func @_stage2_kernel(%arg0: i32, %arg1: i32, %arg2: i32, %arg3: memref<1x8x64xf32, #tpu.memory_space<vmem>>, %arg4: memref<1x8x8xf32, #tpu.memory_space<vmem>>, %arg5: memref<1x8x64xf32, #tpu.memory_space<vmem>>, %arg6: memref<1x64x64xf32, #tpu.memory_space<vmem>>) attributes {dimension_semantics = [#tpu.dimension_semantics<parallel>, #tpu.dimension_semantics<parallel>, #tpu.dimension_semantics<parallel>], iteration_bounds = array<i64: 2, 1, 1>, scalar_prefetch = 0 : i64, scratch_operands = 0 : i64, tpu.core_type = #tpu.core_type<tc>, window_params = [{transform_indices = @transform_0, window_bounds = array<i64: 1, 8, 64>}, {pipeline_mode = #tpu.pipeline_mode<synchronous>, transform_indices = @transform_1, window_bounds = array<i64: 1, 8, 8>}, {pipeline_mode = #tpu.pipeline_mode<synchronous>, transform_indices = @transform_2, window_bounds = array<i64: 1, 8, 64>}, {transform_indices = @transform_3, window_bounds = array<i64: 1, 64, 64>}]} {
    %c0 = arith.constant 0 : index
    %c0_0 = arith.constant 0 : index
    %c0_1 = arith.constant 0 : index
    %0 = vector.load %arg3[%c0, %c0_0, %c0_1] : memref<1x8x64xf32, #tpu.memory_space<vmem>>, vector<1x8x64xf32>
    %1 = vector.shape_cast %0 : vector<1x8x64xf32> to vector<8x64xf32>
    %c0_2 = arith.constant 0 : index
    %c0_3 = arith.constant 0 : index
    %c0_4 = arith.constant 0 : index
    %2 = vector.load %arg4[%c0_2, %c0_3, %c0_4] : memref<1x8x8xf32, #tpu.memory_space<vmem>>, vector<1x8x8xf32>
    %3 = vector.shape_cast %2 : vector<1x8x8xf32> to vector<8x8xf32>
    %cst = arith.constant dense<0.000000e+00> : vector<64x8xf32>
    %4 = tpu.matmul %1, %3, %cst {dimension_numbers = #tpu.dot_dimension_numbers<[0], [0], [1], [1], [0, 1, 1, 1], [], []>} : vector<8x64xf32>, vector<8x8xf32>, vector<64x8xf32> -> vector<64x8xf32>
    %c0_5 = arith.constant 0 : index
    %c0_6 = arith.constant 0 : index
    %c0_7 = arith.constant 0 : index
    %5 = vector.load %arg5[%c0_5, %c0_6, %c0_7] : memref<1x8x64xf32, #tpu.memory_space<vmem>>, vector<1x8x64xf32>
    %6 = vector.shape_cast %5 : vector<1x8x64xf32> to vector<8x64xf32>
    %cst_8 = arith.constant dense<0.000000e+00> : vector<64x64xf32>
    %7 = tpu.matmul %4, %6, %cst_8 {dimension_numbers = #tpu.dot_dimension_numbers<[1], [0], [0], [1], [0, 0, 1, 1], [], []>} : vector<64x8xf32>, vector<8x64xf32>, vector<64x64xf32> -> vector<64x64xf32>
    %c0_9 = arith.constant 0 : index
    %c0_10 = arith.constant 0 : index
    %c0_11 = arith.constant 0 : index
    %8 = vector.load %arg6[%c0_9, %c0_10, %c0_11] : memref<1x64x64xf32, #tpu.memory_space<vmem>>, vector<1x64x64xf32>
    %9 = vector.shape_cast %8 : vector<1x64x64xf32> to vector<64x64xf32>
    %10 = vector.shape_cast %7 : vector<64x64xf32> to vector<1x64x64xf32>
    tpu.vector_store %arg6[%c0_9, %c0_10, %c0_11], %10 {strides = array<i32>} : memref<1x64x64xf32, #tpu.memory_space<vmem>>, vector<1x64x64xf32>,
    return
  }
  func.func @transform_0(%arg0: i32, %arg1: i32, %arg2: i32) -> (i32, i32, i32) {
    %c0_i32 = arith.constant 0 : i32
    %c0_i32_0 = arith.constant 0 : i32
    return %arg0, %c0_i32, %arg1 : i32, i32, i32
  }
  func.func @transform_1(%arg0: i32, %arg1: i32, %arg2: i32) -> (i32, i32, i32) {
    %c0_i32 = arith.constant 0 : i32
    %c0_i32_0 = arith.constant 0 : i32
    %c0_i32_1 = arith.constant 0 : i32
    return %arg0, %c0_i32, %c0_i32_0 : i32, i32, i32
  }
  func.func @transform_2(%arg0: i32, %arg1: i32, %arg2: i32) -> (i32, i32, i32) {
    %c0_i32 = arith.constant 0 : i32
    %c0_i32_0 = arith.constant 0 : i32
    return %arg0, %c0_i32, %arg2 : i32, i32, i32
  }
  func.func @transform_3(%arg0: i32, %arg1: i32, %arg2: i32) -> (i32, i32, i32) {
    %c0_i32 = arith.constant 0 : i32
    return %arg0, %arg1, %arg2 : i32, i32, i32
  }
}

</mosaic_0001>

<llo_original>
// kernel: nystrom_attention_pallas.2
$region0: #{nystrom_attention_pallas.2}
  #allocation0 [shape = 'u32[]', space=smem, size = 0x4, offset = 0x4, fixed_abs, tag = 'smem constant byte address 0x4 - core index']
  #allocation1 [shape = 'u32[144,128]{1,0:T(1,128)}', space=vmem, size = 0x12000, scoped, tag = 'internal scratch']
  %s0 = inlined_call_operand.vmem [shape: f32[2,64,32], index: 0, kind: input, shape index: {}]
  %s1 = inlined_call_operand.vmem [shape: f32[2,64,32], index: 1, kind: input, shape index: {}]
  %s2 = inlined_call_operand.vmem [shape: f32[2,8,32], index: 2, kind: input, shape index: {}]
  %s3 = inlined_call_operand.vmem [shape: f32[2,8,32], index: 3, kind: input, shape index: {}]
  %s4 = inlined_call_operand.vmem [shape: f32[2,8,64], index: 4, kind: output, shape index: {0}]
  %s5 = inlined_call_operand.vmem [shape: f32[2,8,64], index: 5, kind: output, shape index: {1}]
  %6 = xla_tuple %s4, %s5
  %s7 = sld [smem:[#allocation0]]
  $region57: #{nystrom_attention_pallas.2} parent=0
    _
  %s9 = ssub.s32 1, %s7
  %s10 = scalar_select 0, %s9, %s7
  loop: start=0, step=1, limit=4
  $region2: #{nystrom_attention_pallas.2} parent=0 // loop_pre_header
    _
  $region3: #{nystrom_attention_pallas.2} parent=0 // loop_header
    %s12 = sphi 0, %s16
    %p13 = scmp.ge.s32.totalorder %s12, 4
    %s19 = sphi 0, %s31
    %s20 = sphi 0, %s27
    %s21 = sphi 0, %s19
    %s22 = sphi 0, %s20
    %s23 = sphi 0, %s21
    %s24 = sphi 0, %s22
    %s36 = sphi 0, %s38
    %s39 = sphi 0, %s36
    %s40 = sphi 0, %s39
    %s56 = sphi 0, %s40
    %s64 = sphi 0, %s66
    %s67 = sphi 0, %s64
    %s68 = sphi 0, %s67
    %s84 = sphi 0, %s68
    %s90 = sphi 0, %s92
    %s93 = sphi 0, %s90
    %s94 = sphi 0, %s93
    %s110 = sphi 0, %s94
    %s116 = sphi 0, %s118
    %s119 = sphi 0, %s116
    %s120 = sphi 0, %s119
    %s136 = sphi 0, %s120
    %s144 = sphi 0, %s146
    %s147 = sphi 0, %s144
    %s148 = sphi 0, %s147
    %s164 = sphi 0, %s148
    %s172 = sphi 0, %s174
    %s175 = sphi 0, %s172
    %s176 = sphi 0, %s175
    %s192 = sphi 0, %s176
  $region4: #{nystrom_attention_pallas.2} parent=0 // loop_header_branch
    %15 = sbr.rel (%p13) target = $region8
  $region5: #{nystrom_attention_pallas.2} parent=0 // loop_body
    %s17 = ssub.s32 %s12, 1
    %s18 = ssub.s32 %s12, 2
    %s25 = sadd.s32 1, %s20
    %p26 = scmp.ge.s32.totalorder %s25, 1
    %s27 = scalar_select %p26, 0, %s25
    %s28 = sadd.s32 1, %s19
    %s29 = scalar_select %p26, %s28, %s19
    %p30 = scmp.ge.s32.totalorder %s29, 2
    %s31 = scalar_select %p30, 0, %s29
    %s32 = ssub.s32 %s19, %s31
    %s33 = ssub.s32 %s20, %s27
    %s34 = sor.u32 %s32, %s33
    %p35 = scmp.eq.s32.totalorder %s34, 0
    %s37 = sadd.s32 %s36, 1
    %s38 = scalar_select %p35, %s36, %s37
    %p41 = pneg %p35
    %p42 = scmp.eq.s32.totalorder %s12, 1
    %p43 = por %p41, %p42
    %p44 = scmp.ne.s32.totalorder %s36, %s39
    %p45 = scmp.eq.s32.totalorder %s12, 0
    %p46 = por %p44, %p45
    %p47 = scmp.ne.s32.totalorder %s36, %s39
    %p48 = scmp.eq.s32.totalorder %s17, 1
    %p49 = por %p47, %p48
    %p50 = scmp.ne.s32.totalorder %s39, %s40
    %p51 = scmp.eq.s32.totalorder %s17, 0
    %p52 = por %p50, %p51
    %p53 = scmp.ne.s32.totalorder %s39, %s40
    %p54 = scmp.eq.s32.totalorder %s18, 1
    %p55 = por %p53, %p54
    %p57 = scmp.ne.s32.totalorder %s40, %s56
    %p58 = scmp.eq.s32.totalorder %s18, 0
    %p59 = por %p57, %p58
    %s60 = ssub.s32 %s19, %s31
    %s61 = ssub.s32 %s20, %s27
    %s62 = sor.u32 %s60, %s61
    %p63 = scmp.eq.s32.totalorder %s62, 0
    %s65 = sadd.s32 %s64, 1
    %s66 = scalar_select %p63, %s64, %s65
    %p69 = pneg %p63
    %p70 = scmp.eq.s32.totalorder %s12, 1
    %p71 = por %p69, %p70
    %p72 = scmp.ne.s32.totalorder %s64, %s67
    %p73 = scmp.eq.s32.totalorder %s12, 0
    %p74 = por %p72, %p73
    %p75 = scmp.ne.s32.totalorder %s64, %s67
    %p76 = scmp.eq.s32.totalorder %s17, 1
    %p77 = por %p75, %p76
    %p78 = scmp.ne.s32.totalorder %s67, %s68
    %p79 = scmp.eq.s32.totalorder %s17, 0
    %p80 = por %p78, %p79
    %p81 = scmp.ne.s32.totalorder %s67, %s68
    %p82 = scmp.eq.s32.totalorder %s18, 1
    %p83 = por %p81, %p82
    %p85 = scmp.ne.s32.totalorder %s68, %s84
    %p86 = scmp.eq.s32.totalorder %s18, 0
    %p87 = por %p85, %p86
    %s88 = ssub.s32 %s19, %s31
    %p89 = scmp.eq.s32.totalorder %s88, 0
    %s91 = sadd.s32 %s90, 1
    %s92 = scalar_select %p89, %s90, %s91
    %p95 = pneg %p89
    %p96 = scmp.eq.s32.totalorder %s12, 1
    %p97 = por %p95, %p96
    %p98 = scmp.ne.s32.totalorder %s90, %s93
    %p99 = scmp.eq.s32.totalorder %s12, 0
    %p100 = por %p98, %p99
    %p101 = scmp.ne.s32.totalorder %s90, %s93
    %p102 = scmp.eq.s32.totalorder %s17, 1
    %p103 = por %p101, %p102
    %p104 = scmp.ne.s32.totalorder %s93, %s94
    %p105 = scmp.eq.s32.totalorder %s17, 0
    %p106 = por %p104, %p105
    %p107 = scmp.ne.s32.totalorder %s93, %s94
    %p108 = scmp.eq.s32.totalorder %s18, 1
    %p109 = por %p107, %p108
    %p111 = scmp.ne.s32.totalorder %s94, %s110
    %p112 = scmp.eq.s32.totalorder %s18, 0
    %p113 = por %p111, %p112
    %s114 = ssub.s32 %s19, %s31
    %p115 = scmp.eq.s32.totalorder %s114, 0
    %s117 = sadd.s32 %s116, 1
    %s118 = scalar_select %p115, %s116, %s117
    %p121 = pneg %p115
    %p122 = scmp.eq.s32.totalorder %s12, 1
    %p123 = por %p121, %p122
    %p124 = scmp.ne.s32.totalorder %s116, %s119
    %p125 = scmp.eq.s32.totalorder %s12, 0
    %p126 = por %p124, %p125
    %p127 = scmp.ne.s32.totalorder %s116, %s119
    %p128 = scmp.eq.s32.totalorder %s17, 1
    %p129 = por %p127, %p128
    %p130 = scmp.ne.s32.totalorder %s119, %s120
    %p131 = scmp.eq.s32.totalorder %s17, 0
    %p132 = por %p130, %p131
    %p133 = scmp.ne.s32.totalorder %s119, %s120
    %p134 = scmp.eq.s32.totalorder %s18, 1
    %p135 = por %p133, %p134
    %p137 = scmp.ne.s32.totalorder %s120, %s136
    %p138 = scmp.eq.s32.totalorder %s18, 0
    %p139 = por %p137, %p138
    %s140 = ssub.s32 %s19, %s31
    %s141 = ssub.s32 %s20, %s27
    %s142 = sor.u32 %s140, %s141
    %p143 = scmp.eq.s32.totalorder %s142, 0
    %s145 = sadd.s32 %s144, 1
    %s146 = scalar_select %p143, %s144, %s145
    %p149 = pneg %p143
    %p150 = scmp.eq.s32.totalorder %s12, 1
    %p151 = por %p149, %p150
    %p152 = scmp.ne.s32.totalorder %s144, %s147
    %p153 = scmp.eq.s32.totalorder %s12, 0
    %p154 = por %p152, %p153
    %p155 = scmp.ne.s32.totalorder %s144, %s147
    %p156 = scmp.eq.s32.totalorder %s17, 1
    %p157 = por %p155, %p156
    %p158 = scmp.ne.s32.totalorder %s147, %s148
    %p159 = scmp.eq.s32.totalorder %s17, 0
    %p160 = por %p158, %p159
    %p161 = scmp.ne.s32.totalorder %s147, %s148
    %p162 = scmp.eq.s32.totalorder %s18, 1
    %p163 = por %p161, %p162
    %p165 = scmp.ne.s32.totalorder %s148, %s164
    %p166 = scmp.eq.s32.totalorder %s18, 0
    %p167 = por %p165, %p166
    %s168 = ssub.s32 %s19, %s31
    %s169 = ssub.s32 %s20, %s27
    %s170 = sor.u32 %s168, %s169
    %p171 = scmp.eq.s32.totalorder %s170, 0
    %s173 = sadd.s32 %s172, 1
    %s174 = scalar_select %p171, %s172, %s173
    %p177 = pneg %p171
    %p178 = scmp.eq.s32.totalorder %s12, 1
    %p179 = por %p177, %p178
    %p180 = scmp.ne.s32.totalorder %s172, %s175
    %p181 = scmp.eq.s32.totalorder %s12, 0
    %p182 = por %p180, %p181
    %p183 = scmp.ne.s32.totalorder %s172, %s175
    %p184 = scmp.eq.s32.totalorder %s17, 1
    %p185 = por %p183, %p184
    %p186 = scmp.ne.s32.totalorder %s175, %s176
    %p187 = scmp.eq.s32.totalorder %s17, 0
    %p188 = por %p186, %p187
    %p189 = scmp.ne.s32.totalorder %s175, %s176
    %p190 = scmp.eq.s32.totalorder %s18, 1
    %p191 = por %p189, %p190
    %p193 = scmp.ne.s32.totalorder %s176, %s192
    %p194 = scmp.eq.s32.totalorder %s18, 0
    %p195 = por %p193, %p194
    %p196 = scmp.le.s32.totalorder 1, %s12
    %p197 = scmp.lt.s32.totalorder %s12, 3
    %p198 = pnand %p196, %p197
    %p199 = pneg %p198
    // Predicated region
    $region9: #{nystrom_attention_pallas.2} parent=5 // pred_check
      _
    $region10: #{nystrom_attention_pallas.2} parent=5 // pred_check_branch
      %201 = sbr.rel (%p198) target = $region12
    $region11: #{nystrom_attention_pallas.2} parent=5 // pred_region
      %s202 = ssub.s32 %s12, 1
    $region12: #{nystrom_attention_pallas.2} parent=5 // pred_fallthru
      _
    %p203 = scmp.lt.s32.totalorder %s12, 2
    // Predicated region
    $region13: #{nystrom_attention_pallas.2} parent=5 // pred_check
      %p204 = pneg %p203
    $region14: #{nystrom_attention_pallas.2} parent=5 // pred_check_branch
      %206 = sbr.rel (%p204) target = $region16
    $region15: #{nystrom_attention_pallas.2} parent=5 // pred_region
      // Predicated region
      $region17: #{nystrom_attention_pallas.2} parent=15 // pred_check
        %p207 = pneg %p46
      $region18: #{nystrom_attention_pallas.2} parent=15 // pred_check_branch
        %209 = sbr.rel (%p207) target = $region20
      $region19: #{nystrom_attention_pallas.2} parent=15 // pred_region
        %s210 = smul.u32 8, %s20
        %p211 = scmp.lt.s32.totalorder %s19, 1
        %s212 = scalar_select %p211, %s19, 1
        %p213 = scmp.lt.s32.totalorder %s210, 7
        %s214 = scalar_select %p213, %s210, 7
        %s215 = smul.addr %s212, 8
        %s216 = sadd.s32 %s214, %s215
        %s217 = smul.addr %s216, 8
        %s218 = scalar_lea.vmem %s0, %s217
        %s219 = smul.u32 8, %s20
      $region20: #{nystrom_attention_pallas.2} parent=15 // pred_fallthru
        _
      // Predicated region
      $region21: #{nystrom_attention_pallas.2} parent=15 // pred_check
        %p220 = pneg %p74
      $region22: #{nystrom_attention_pallas.2} parent=15 // pred_check_branch
        %222 = sbr.rel (%p220) target = $region24
      $region23: #{nystrom_attention_pallas.2} parent=15 // pred_region
        %s223 = smul.u32 8, %s20
        %p224 = scmp.lt.s32.totalorder %s19, 1
        %s225 = scalar_select %p224, %s19, 1
        %p226 = scmp.lt.s32.totalorder %s223, 7
        %s227 = scalar_select %p226, %s223, 7
        %s228 = smul.addr %s225, 8
        %s229 = sadd.s32 %s227, %s228
        %s230 = smul.addr %s229, 8
        %s231 = scalar_lea.vmem %s1, %s230
        %s232 = smul.u32 8, %s20
      $region24: #{nystrom_attention_pallas.2} parent=15 // pred_fallthru
        _
      // Predicated region
      $region25: #{nystrom_attention_pallas.2} parent=15 // pred_check
        %p233 = pneg %p100
      $region26: #{nystrom_attention_pallas.2} parent=15 // pred_check_branch
        %235 = sbr.rel (%p233) target = $region28
      $region27: #{nystrom_attention_pallas.2} parent=15 // pred_region
        %p236 = scmp.lt.s32.totalorder %s19, 1
        %s237 = scalar_select %p236, %s19, 1
        %s238 = smul.addr %s237, 8
        %s239 = scalar_lea.vmem %s2, %s238
      $region28: #{nystrom_attention_pallas.2} parent=15 // pred_fallthru
        _
      // Predicated region
      $region29: #{nystrom_attention_pallas.2} parent=15 // pred_check
        %p240 = pneg %p126
      $region30: #{nystrom_attention_pallas.2} parent=15 // pred_check_branch
        %242 = sbr.rel (%p240) target = $region32
      $region31: #{nystrom_attention_pallas.2} parent=15 // pred_region
        %p243 = scmp.lt.s32.totalorder %s19, 1
        %s244 = scalar_select %p243, %s19, 1
        %s245 = smul.addr %s244, 8
        %s246 = scalar_lea.vmem %s3, %s245
      $region32: #{nystrom_attention_pallas.2} parent=15 // pred_fallthru
        _
    $region16: #{nystrom_attention_pallas.2} parent=5 // pred_fallthru
      _
    %p247 = scmp.le.s32.totalorder 1, %s12
    %p248 = scmp.lt.s32.totalorder %s12, 3
    %p249 = pnand %p247, %p248
    %p250 = pneg %p249
    // Predicated region
    $region33: #{nystrom_attention_pallas.2} parent=5 // pred_check
      _
    $region34: #{nystrom_attention_pallas.2} parent=5 // pred_check_branch
      %252 = sbr.rel (%p249) target = $region36
    $region35: #{nystrom_attention_pallas.2} parent=5 // pred_region
      %s253 = ssub.s32 %s12, 1
      %s254 = smul.u32 8, %s22
      %p255 = scmp.lt.s32.totalorder %s21, 1
      %s256 = scalar_select %p255, %s21, 1
      %p257 = scmp.lt.s32.totalorder %s254, 7
      %s258 = scalar_select %p257, %s254, 7
      %s259 = smul.addr %s256, 8
      %s260 = sadd.s32 %s258, %s259
      %s261 = smul.addr %s260, 8
      %s262 = scalar_lea.vmem %s0, %s261
      %p263 = pneg %p52
      %p264 = pneg %p49
      %s265 = smul.u32 8, %s22
      %p266 = scmp.lt.s32.totalorder %s21, 1
      %s267 = scalar_select %p266, %s21, 1
      %p268 = scmp.lt.s32.totalorder %s265, 7
      %s269 = scalar_select %p268, %s265, 7
      %s270 = smul.addr %s267, 8
      %s271 = sadd.s32 %s269, %s270
      %s272 = smul.addr %s271, 8
      %s273 = scalar_lea.vmem %s1, %s272
      %p274 = pneg %p80
      %p275 = pneg %p77
      %p276 = scmp.lt.s32.totalorder %s21, 1
      %s277 = scalar_select %p276, %s21, 1
      %s278 = smul.addr %s277, 8
      %s279 = scalar_lea.vmem %s2, %s278
      %p280 = pneg %p106
      %p281 = pneg %p103
      %p282 = scmp.lt.s32.totalorder %s21, 1
      %s283 = scalar_select %p282, %s21, 1
      %s284 = smul.addr %s283, 8
      %s285 = scalar_lea.vmem %s3, %s284
      %p286 = pneg %p132
      %p287 = pneg %p129
      %p288 = pneg %p160
      %p289 = pneg %p157
      %p290 = scmp.lt.s32.totalorder %s21, 1
      %s291 = scalar_select %p290, %s21, 1
      %p292 = scmp.lt.s32.totalorder %s22, 0
      %s293 = scalar_select %p292, %s22, 0
      %s294 = sadd.s32 %s293, %s291
      %s295 = smul.addr %s294, 8
      %s296 = scalar_lea.vmem %s4, %s295
      %p297 = pneg %p188
      %p298 = pneg %p185
      %p299 = scmp.lt.s32.totalorder %s21, 1
      %s300 = scalar_select %p299, %s21, 1
      %p301 = scmp.lt.s32.totalorder %s22, 0
      %s302 = scalar_select %p301, %s22, 0
      %s303 = sadd.s32 %s302, %s300
      %s304 = smul.addr %s303, 8
      %s305 = scalar_lea.vmem %s5, %s304
      %s306 = smul.u32 8, %s22
      %p307 = scmp.lt.s32.totalorder %s21, 1
      %s308 = scalar_select %p307, %s21, 1
      %p309 = scmp.lt.s32.totalorder %s306, 7
      %s310 = scalar_select %p309, %s306, 7
      %s311 = smul.addr %s308, 8
      %s312 = sadd.s32 %s310, %s311
      %s313 = smul.addr %s312, 8
      %s314 = scalar_lea.vmem %s0, %s313
      %s315 = smul.u32 8, %s22
      %s316 = smul.u32 8, %s22
      %p317 = scmp.lt.s32.totalorder %s21, 1
      %s318 = scalar_select %p317, %s21, 1
      %p319 = scmp.lt.s32.totalorder %s316, 7
      %s320 = scalar_select %p319, %s316, 7
      %s321 = smul.addr %s318, 8
      %s322 = sadd.s32 %s320, %s321
      %s323 = smul.addr %s322, 8
      %s324 = scalar_lea.vmem %s1, %s323
      %s325 = smul.u32 8, %s22
      %p326 = scmp.lt.s32.totalorder %s21, 1
      %s327 = scalar_select %p326, %s21, 1
      %s328 = smul.addr %s327, 8
      %s329 = scalar_lea.vmem %s2, %s328
      %p330 = scmp.lt.s32.totalorder %s21, 1
      %s331 = scalar_select %p330, %s21, 1
      %s332 = smul.addr %s331, 8
      %s333 = scalar_lea.vmem %s3, %s332
      %p334 = scmp.lt.s32.totalorder %s21, 1
      %s335 = scalar_select %p334, %s21, 1
      %p336 = scmp.lt.s32.totalorder %s22, 0
      %s337 = scalar_select %p336, %s22, 0
      %s338 = sadd.s32 %s337, %s335
      %s339 = smul.addr %s338, 8
      %s340 = scalar_lea.vmem %s4, %s339
      %p341 = scmp.lt.s32.totalorder %s21, 1
      %s342 = scalar_select %p341, %s21, 1
      %p343 = scmp.lt.s32.totalorder %s22, 0
      %s344 = scalar_select %p343, %s22, 0
      %s345 = sadd.s32 %s344, %s342
      %s346 = smul.addr %s345, 8
      %s347 = scalar_lea.vmem %s5, %s346
      %v348 = vld [vmem:[%s333] sm:$0xff]
      %v349 = vld [vmem:[%s314] sm:$0xff]
      %v350 = vld [vmem:[%s314 + $0x8] sm:$0xff]
      %v351 = vld [vmem:[%s314 + $0x10] sm:$0xff]
      %v352 = vld [vmem:[%s314 + $0x18] sm:$0xff]
      %v353 = vld [vmem:[%s314 + $0x20] sm:$0xff]
      %v354 = vld [vmem:[%s314 + $0x28] sm:$0xff]
      %v355 = vld [vmem:[%s314 + $0x30] sm:$0xff]
      %v356 = vld [vmem:[%s314 + $0x38] sm:$0xff]
      %vm357 = vcmask 261120
      %v359 = vsel %vm357, %v348, 0
      %v362 = vsel %vm357, %v349, 0
      %v365 = vsel %vm357, %v350, 0
      %v368 = vsel %vm357, %v351, 0
      %v371 = vsel %vm357, %v352, 0
      %v374 = vsel %vm357, %v353, 0
      %v377 = vsel %vm357, %v354, 0
      %v380 = vsel %vm357, %v355, 0
      %v383 = vsel %vm357, %v356, 0
      %385 = vmatprep.subr.mxu0 0.0
      %386 = vmatpush1.xpose.msra.mxu0 %v362
      %387 = vmatprep.subr.mxu0 0.0
      %388 = vmatpush1.xpose.msra.mxu0 %v365
      %389 = vmatprep.subr.mxu0 0.0
      %390 = vmatpush1.xpose.msra.mxu0 %v368
      %391 = vmatprep.subr.mxu0 0.0
      %392 = vmatpush1.xpose.msra.mxu0 %v371
      %393 = vmatprep.subr.mxu0 0.0
      %394 = vmatpush1.xpose.msra.mxu0 %v374
      %395 = vmatprep.subr.mxu0 0.0
      %396 = vmatpush1.xpose.msra.mxu0 %v377
      %397 = vmatprep.subr.mxu0 0.0
      %398 = vmatpush1.xpose.msra.mxu0 %v380
      %399 = vmatprep.subr.mxu0 0.0
      %400 = vmatpush1.xpose.msra.mxu0 %v383
      %401 = vmatprep.subr.mxu0 0.0
      %402 = vmatpush1.xpose.msra.mxu0 0.0
      %403 = vmatprep.subr.mxu0 0.0
      %404 = vmatpush1.xpose.msra.mxu0 0.0
      %405 = vmatprep.subr.mxu0 0.0
      %406 = vmatpush1.xpose.msra.mxu0 0.0
      %407 = vmatprep.subr.mxu0 0.0
      %408 = vmatpush1.xpose.msra.mxu0 0.0
      %409 = vmatprep.subr.mxu0 0.0
      %410 = vmatpush1.xpose.msra.mxu0 0.0
      %411 = vmatprep.subr.mxu0 0.0
      %412 = vmatpush1.xpose.msra.mxu0 0.0
      %413 = vmatprep.subr.mxu0 0.0
      %414 = vmatpush1.xpose.msra.mxu0 0.0
      %415 = vmatprep.subr.mxu0 0.0
      %416 = vmatpush1.xpose.msra.mxu0 0.0
      %417 = vmatprep.subr.mxu0 0.0
      %418 = vmatpush1.xpose.msra.mxu0 0.0
      %419 = vmatprep.subr.mxu0 0.0
      %420 = vmatpush1.xpose.msra.mxu0 0.0
      %421 = vmatprep.subr.mxu0 0.0
      %422 = vmatpush1.xpose.msra.mxu0 0.0
      %423 = vmatprep.subr.mxu0 0.0
      %424 = vmatpush1.xpose.msra.mxu0 0.0
      %425 = vmatprep.subr.mxu0 0.0
      %426 = vmatpush1.xpose.msra.mxu0 0.0
      %427 = vmatprep.subr.mxu0 0.0
      %428 = vmatpush1.xpose.msra.mxu0 0.0
      %429 = vmatprep.subr.mxu0 0.0
      %430 = vmatpush1.xpose.msra.mxu0 0.0
      %431 = vmatprep.subr.mxu0 0.0
      %432 = vmatpush1.xpose.msra.mxu0 0.0
      %433 = vmatprep.subr.mxu0 0.0
      %434 = vmatpush1.xpose.msra.mxu0 0.0
      %435 = vmatprep.subr.mxu0 0.0
      %436 = vmatpush1.xpose.msra.mxu0 0.0
      %437 = vmatprep.subr.mxu0 0.0
      %438 = vmatpush1.xpose.msra.mxu0 0.0
      %439 = vmatprep.subr.mxu0 0.0
      %440 = vmatpush1.xpose.msra.mxu0 0.0
      %441 = vmatprep.subr.mxu0 0.0
      %442 = vmatpush1.xpose.msra.mxu0 0.0
      %443 = vmatprep.subr.mxu0 0.0
      %444 = vmatpush1.xpose.msra.mxu0 0.0
      %445 = vmatprep.subr.mxu0 0.0
      %446 = vmatpush1.xpose.msra.mxu0 0.0
      %447 = vmatprep.subr.mxu0 0.0
      %448 = vmatpush1.xpose.msra.mxu0 0.0
      %449 = vmatprep.mubr.f32.mxu0 0.0
      %450 = vmatmul.mubr.f32.gmra.mrb[0].mxu0 %v359
      %v451 = vpop.f32.mrb[0].mxu0
      %v452 = vadd.f32 0.0, %v451
      %v453 = vpop.f32.mrb[0].mxu0
      %454 = vdwg.mxu0
      %vm455 = vcmask 523264
      %v456 = vsel %vm455, %v452, -inf
      %v457 = vrot.slane %v456, 4
      %v458 = vmax.f32 %v456, %v457
      %v459 = vrot.slane %v458, 2
      %v460 = vmax.f32 %v458, %v459
      %v461 = vrot.slane %v460, 1
      %v462 = vmax.f32 %v460, %v461
      %v463 = vsub.f32 %v452, %v462
      %v464 = vmul.f32 %v463, 1.442695
      %v465 = vpow.pop %v464
      %v466 = vsel %vm455, %v465, 0.0
      %v467 = vrot.slane %v466, 4
      %v468 = vadd.f32 %v466, %v467
      %v469 = vrot.slane %v468, 2
      %v470 = vadd.f32 %v468, %v469
      %v471 = vrot.slane %v470, 1
      %v472 = vadd.f32 %v470, %v471
      %v473 = vrcp.pop %v472
      %v474 = vmul.f32 %v465, %v473
      %475 = vst.msk [vmem:[%s340] sm:$0xff] %vm455, %v474
      %v476 = vld [vmem:[%s329] sm:$0xff]
      %v477 = vld [vmem:[%s324] sm:$0xff]
      %v478 = vld [vmem:[%s324 + $0x8] sm:$0xff]
      %v479 = vld [vmem:[%s324 + $0x10] sm:$0xff]
      %v480 = vld [vmem:[%s324 + $0x18] sm:$0xff]
      %v481 = vld [vmem:[%s324 + $0x20] sm:$0xff]
      %v482 = vld [vmem:[%s324 + $0x28] sm:$0xff]
      %v483 = vld [vmem:[%s324 + $0x30] sm:$0xff]
      %v484 = vld [vmem:[%s324 + $0x38] sm:$0xff]
      %v486 = vsel %vm357, %v476, 0
      %v489 = vsel %vm357, %v477, 0
      %v492 = vsel %vm357, %v478, 0
      %v495 = vsel %vm357, %v479, 0
      %v498 = vsel %vm357, %v480, 0
      %v501 = vsel %vm357, %v481, 0
      %v504 = vsel %vm357, %v482, 0
      %v507 = vsel %vm357, %v483, 0
      %v510 = vsel %vm357, %v484, 0
      %512 = vmatprep.subr.mxu0 0.0
      %513 = vmatpush1.xpose.msra.mxu0 %v489
      %514 = vmatprep.subr.mxu0 0.0
      %515 = vmatpush1.xpose.msra.mxu0 %v492
      %516 = vmatprep.subr.mxu0 0.0
      %517 = vmatpush1.xpose.msra.mxu0 %v495
      %518 = vmatprep.subr.mxu0 0.0
      %519 = vmatpush1.xpose.msra.mxu0 %v498
      %520 = vmatprep.subr.mxu0 0.0
      %521 = vmatpush1.xpose.msra.mxu0 %v501
      %522 = vmatprep.subr.mxu0 0.0
      %523 = vmatpush1.xpose.msra.mxu0 %v504
      %524 = vmatprep.subr.mxu0 0.0
      %525 = vmatpush1.xpose.msra.mxu0 %v507
      %526 = vmatprep.subr.mxu0 0.0
      %527 = vmatpush1.xpose.msra.mxu0 %v510
      %528 = vmatprep.subr.mxu0 0.0
      %529 = vmatpush1.xpose.msra.mxu0 0.0
      %530 = vmatprep.subr.mxu0 0.0
      %531 = vmatpush1.xpose.msra.mxu0 0.0
      %532 = vmatprep.subr.mxu0 0.0
      %533 = vmatpush1.xpose.msra.mxu0 0.0
      %534 = vmatprep.subr.mxu0 0.0
      %535 = vmatpush1.xpose.msra.mxu0 0.0
      %536 = vmatprep.subr.mxu0 0.0
      %537 = vmatpush1.xpose.msra.mxu0 0.0
      %538 = vmatprep.subr.mxu0 0.0
      %539 = vmatpush1.xpose.msra.mxu0 0.0
      %540 = vmatprep.subr.mxu0 0.0
      %541 = vmatpush1.xpose.msra.mxu0 0.0
      %542 = vmatprep.subr.mxu0 0.0
      %543 = vmatpush1.xpose.msra.mxu0 0.0
      %544 = vmatprep.subr.mxu0 0.0
      %545 = vmatpush1.xpose.msra.mxu0 0.0
      %546 = vmatprep.subr.mxu0 0.0
      %547 = vmatpush1.xpose.msra.mxu0 0.0
      %548 = vmatprep.subr.mxu0 0.0
      %549 = vmatpush1.xpose.msra.mxu0 0.0
      %550 = vmatprep.subr.mxu0 0.0
      %551 = vmatpush1.xpose.msra.mxu0 0.0
      %552 = vmatprep.subr.mxu0 0.0
      %553 = vmatpush1.xpose.msra.mxu0 0.0
      %554 = vmatprep.subr.mxu0 0.0
      %555 = vmatpush1.xpose.msra.mxu0 0.0
      %556 = vmatprep.subr.mxu0 0.0
      %557 = vmatpush1.xpose.msra.mxu0 0.0
      %558 = vmatprep.subr.mxu0 0.0
      %559 = vmatpush1.xpose.msra.mxu0 0.0
      %560 = vmatprep.subr.mxu0 0.0
      %561 = vmatpush1.xpose.msra.mxu0 0.0
      %562 = vmatprep.subr.mxu0 0.0
      %563 = vmatpush1.xpose.msra.mxu0 0.0
      %564 = vmatprep.subr.mxu0 0.0
      %565 = vmatpush1.xpose.msra.mxu0 0.0
      %566 = vmatprep.subr.mxu0 0.0
      %567 = vmatpush1.xpose.msra.mxu0 0.0
      %568 = vmatprep.subr.mxu0 0.0
      %569 = vmatpush1.xpose.msra.mxu0 0.0
      %570 = vmatprep.subr.mxu0 0.0
      %571 = vmatpush1.xpose.msra.mxu0 0.0
      %572 = vmatprep.subr.mxu0 0.0
      %573 = vmatpush1.xpose.msra.mxu0 0.0
      %574 = vmatprep.subr.mxu0 0.0
      %575 = vmatpush1.xpose.msra.mxu0 0.0
      %576 = vmatprep.mubr.f32.mxu0 0.0
      %577 = vmatmul.mubr.f32.gmra.mrb[0].mxu0 %v486
      %v578 = vpop.f32.mrb[0].mxu0
      %v579 = vadd.f32 0.0, %v578
      %v580 = vpop.f32.mrb[0].mxu0
      %581 = vdwg.mxu0
      %582 = vst.msk [vmem:[%s347] sm:$0xff] %vm455, %v579
      %p583 = scmp.lt.s32.totalorder %s21, 1
      %s584 = scalar_select %p583, %s21, 1
      %p585 = scmp.lt.s32.totalorder %s22, 0
      %s586 = scalar_select %p585, %s22, 0
      %s587 = sadd.s32 %s586, %s584
      %s588 = smul.addr %s587, 8
      %s589 = scalar_lea.vmem %s4, %s588
      %p590 = scmp.lt.s32.totalorder %s21, 1
      %s591 = scalar_select %p590, %s21, 1
      %p592 = scmp.lt.s32.totalorder %s22, 0
      %s593 = scalar_select %p592, %s22, 0
      %s594 = sadd.s32 %s593, %s591
      %s595 = smul.addr %s594, 8
      %s596 = scalar_lea.vmem %s5, %s595
      // Predicated region
      $region37: #{nystrom_attention_pallas.2} parent=35 // pred_check
        %p597 = pneg %p157
      $region38: #{nystrom_attention_pallas.2} parent=35 // pred_check_branch
        %599 = sbr.rel (%p597) target = $region40
      $region39: #{nystrom_attention_pallas.2} parent=35 // pred_region
        _
      $region40: #{nystrom_attention_pallas.2} parent=35 // pred_fallthru
        _
      // Predicated region
      $region41: #{nystrom_attention_pallas.2} parent=35 // pred_check
        %p600 = pneg %p185
      $region42: #{nystrom_attention_pallas.2} parent=35 // pred_check_branch
        %602 = sbr.rel (%p600) target = $region44
      $region43: #{nystrom_attention_pallas.2} parent=35 // pred_region
        _
      $region44: #{nystrom_attention_pallas.2} parent=35 // pred_fallthru
        _
    $region36: #{nystrom_attention_pallas.2} parent=5 // pred_fallthru
      _
    %p603 = scmp.le.s32.totalorder 2, %s12
    // Predicated region
    $region45: #{nystrom_attention_pallas.2} parent=5 // pred_check
      %p604 = pneg %p603
    $region46: #{nystrom_attention_pallas.2} parent=5 // pred_check_branch
      %606 = sbr.rel (%p604) target = $region48
    $region47: #{nystrom_attention_pallas.2} parent=5 // pred_region
      %s607 = ssub.s32 %s12, 2
      // Predicated region
      $region49: #{nystrom_attention_pallas.2} parent=47 // pred_check
        %p608 = pneg %p163
      $region50: #{nystrom_attention_pallas.2} parent=47 // pred_check_branch
        %610 = sbr.rel (%p608) target = $region52
      $region51: #{nystrom_attention_pallas.2} parent=47 // pred_region
        %p611 = scmp.lt.s32.totalorder %s23, 1
        %s612 = scalar_select %p611, %s23, 1
        %p613 = scmp.lt.s32.totalorder %s24, 0
        %s614 = scalar_select %p613, %s24, 0
        %s615 = sadd.s32 %s614, %s612
        %s616 = smul.addr %s615, 8
        %s617 = scalar_lea.vmem %s4, %s616
      $region52: #{nystrom_attention_pallas.2} parent=47 // pred_fallthru
        _
      // Predicated region
      $region53: #{nystrom_attention_pallas.2} parent=47 // pred_check
        %p618 = pneg %p191
      $region54: #{nystrom_attention_pallas.2} parent=47 // pred_check_branch
        %620 = sbr.rel (%p618) target = $region56
      $region55: #{nystrom_attention_pallas.2} parent=47 // pred_region
        %p621 = scmp.lt.s32.totalorder %s23, 1
        %s622 = scalar_select %p621, %s23, 1
        %p623 = scmp.lt.s32.totalorder %s24, 0
        %s624 = scalar_select %p623, %s24, 0
        %s625 = sadd.s32 %s624, %s622
        %s626 = smul.addr %s625, 8
        %s627 = scalar_lea.vmem %s5, %s626
      $region56: #{nystrom_attention_pallas.2} parent=47 // pred_fallthru
        _
    $region48: #{nystrom_attention_pallas.2} parent=5 // pred_fallthru
      _
  $region6: #{nystrom_attention_pallas.2} parent=0 // loop_footer
    %s16 = sadd.s32 1, %s12
  $region7: #{nystrom_attention_pallas.2} parent=0 // loop_footer_branch
    %11 = sbr.rel target = $region3
  $region8: #{nystrom_attention_pallas.2} parent=0 // loop_exit
    _

// kernel: nystrom_attention_pallas.3
$region0: #{nystrom_attention_pallas.3}
  #allocation0 [shape = 'u32[]', space=smem, size = 0x4, offset = 0x4, fixed_abs, tag = 'smem constant byte address 0x4 - core index']
  #allocation1 [shape = 'u32[144,128]{1,0:T(1,128)}', space=vmem, size = 0x12000, scoped, tag = 'internal scratch']
  %s0 = inlined_call_operand.vmem [shape: f32[2,8,64], index: 0, kind: input, shape index: {}]
  %s1 = inlined_call_operand.vmem [shape: f32[2,8,8], index: 1, kind: input, shape index: {}]
  %s2 = inlined_call_operand.vmem [shape: f32[2,8,64], index: 2, kind: input, shape index: {}]
  %s3 = inlined_call_operand.hbm [shape: f32[2,64,64], index: 3, kind: output, shape index: {}]
  %s4 = sld [smem:[#allocation0]]
  $region45: #{nystrom_attention_pallas.3} parent=0
    _
  %s6 = ssub.s32 1, %s4
  %s7 = scalar_select 0, %s6, %s4
  $region1: #{nystrom_attention_pallas.3} parent=0
    #allocation2 [shape = 'u8[65536]{0}', space=vmem, size = 0x10000, scoped, tag = 'output window, operand 0']
    #allocation3 [shape = 's32[2]{0}', space=sflag, size = 0x8, scoped, tag = 'scoped memory for nystrom_attention_pallas.3']
    %8 = vsyncpa [#allocation3], 0
    %s9 = scalar_lea.sflag [#allocation3], 1
    %10 = vsyncpa %s9, 0
    loop: start=0, step=1, limit=4
    $region2: #{nystrom_attention_pallas.3} parent=1 // loop_pre_header
      _
    $region3: #{nystrom_attention_pallas.3} parent=1 // loop_header
      %s12 = sphi 0, %s16
      %p13 = scmp.ge.s32.totalorder %s12, 4
      %s19 = sphi 0, %s38
      %s20 = sphi 0, %s34
      %s21 = sphi 0, %s30
      %s22 = sphi 0, %s19
      %s23 = sphi 0, %s20
      %s24 = sphi 0, %s21
      %s25 = sphi 0, %s22
      %s26 = sphi 0, %s23
      %s27 = sphi 0, %s24
      %s43 = sphi 0, %s45
      %s46 = sphi 0, %s43
      %s47 = sphi 0, %s46
      %s63 = sphi 0, %s47
      %s69 = sphi 0, %s71
      %s72 = sphi 0, %s69
      %s73 = sphi 0, %s72
      %s89 = sphi 0, %s73
      %s97 = sphi 0, %s99
      %s100 = sphi 0, %s97
      %s101 = sphi 0, %s100
      %s117 = sphi 0, %s101
      %s127 = sphi 0, %s129
      %s130 = sphi 0, %s127
      %s131 = sphi 0, %s130
      %s147 = sphi 0, %s131
    $region4: #{nystrom_attention_pallas.3} parent=1 // loop_header_branch
      %15 = sbr.rel (%p13) target = $region8
    $region5: #{nystrom_attention_pallas.3} parent=1 // loop_body
      %s17 = ssub.s32 %s12, 1
      %s18 = ssub.s32 %s12, 2
      %s28 = sadd.s32 1, %s21
      %p29 = scmp.ge.s32.totalorder %s28, 1
      %s30 = scalar_select %p29, 0, %s28
      %s31 = sadd.s32 1, %s20
      %s32 = scalar_select %p29, %s31, %s20
      %p33 = scmp.ge.s32.totalorder %s32, 1
      %s34 = scalar_select %p33, 0, %s32
      %s35 = sadd.s32 1, %s19
      %s36 = scalar_select %p33, %s35, %s19
      %p37 = scmp.ge.s32.totalorder %s36, 2
      %s38 = scalar_select %p37, 0, %s36
      %s39 = ssub.s32 %s19, %s38
      %s40 = ssub.s32 %s20, %s34
      %s41 = sor.u32 %s39, %s40
      %p42 = scmp.eq.s32.totalorder %s41, 0
      %s44 = sadd.s32 %s43, 1
      %s45 = scalar_select %p42, %s43, %s44
      %p48 = pneg %p42
      %p49 = scmp.eq.s32.totalorder %s12, 1
      %p50 = por %p48, %p49
      %p51 = scmp.ne.s32.totalorder %s43, %s46
      %p52 = scmp.eq.s32.totalorder %s12, 0
      %p53 = por %p51, %p52
      %p54 = scmp.ne.s32.totalorder %s43, %s46
      %p55 = scmp.eq.s32.totalorder %s17, 1
      %p56 = por %p54, %p55
      %p57 = scmp.ne.s32.totalorder %s46, %s47
      %p58 = scmp.eq.s32.totalorder %s17, 0
      %p59 = por %p57, %p58
      %p60 = scmp.ne.s32.totalorder %s46, %s47
      %p61 = scmp.eq.s32.totalorder %s18, 1
      %p62 = por %p60, %p61
      %p64 = scmp.ne.s32.totalorder %s47, %s63
      %p65 = scmp.eq.s32.totalorder %s18, 0
      %p66 = por %p64, %p65
      %s67 = ssub.s32 %s19, %s38
      %p68 = scmp.eq.s32.totalorder %s67, 0
      %s70 = sadd.s32 %s69, 1
      %s71 = scalar_select %p68, %s69, %s70
      %p74 = pneg %p68
      %p75 = scmp.eq.s32.totalorder %s12, 1
      %p76 = por %p74, %p75
      %p77 = scmp.ne.s32.totalorder %s69, %s72
      %p78 = scmp.eq.s32.totalorder %s12, 0
      %p79 = por %p77, %p78
      %p80 = scmp.ne.s32.totalorder %s69, %s72
      %p81 = scmp.eq.s32.totalorder %s17, 1
      %p82 = por %p80, %p81
      %p83 = scmp.ne.s32.totalorder %s72, %s73
      %p84 = scmp.eq.s32.totalorder %s17, 0
      %p85 = por %p83, %p84
      %p86 = scmp.ne.s32.totalorder %s72, %s73
      %p87 = scmp.eq.s32.totalorder %s18, 1
      %p88 = por %p86, %p87
      %p90 = scmp.ne.s32.totalorder %s73, %s89
      %p91 = scmp.eq.s32.totalorder %s18, 0
      %p92 = por %p90, %p91
      %s93 = ssub.s32 %s19, %s38
      %s94 = ssub.s32 %s21, %s30
      %s95 = sor.u32 %s93, %s94
      %p96 = scmp.eq.s32.totalorder %s95, 0
      %s98 = sadd.s32 %s97, 1
      %s99 = scalar_select %p96, %s97, %s98
      %p102 = pneg %p96
      %p103 = scmp.eq.s32.totalorder %s12, 1
      %p104 = por %p102, %p103
      %p105 = scmp.ne.s32.totalorder %s97, %s100
      %p106 = scmp.eq.s32.totalorder %s12, 0
      %p107 = por %p105, %p106
      %p108 = scmp.ne.s32.totalorder %s97, %s100
      %p109 = scmp.eq.s32.totalorder %s17, 1
      %p110 = por %p108, %p109
      %p111 = scmp.ne.s32.totalorder %s100, %s101
      %p112 = scmp.eq.s32.totalorder %s17, 0
      %p113 = por %p111, %p112
      %p114 = scmp.ne.s32.totalorder %s100, %s101
      %p115 = scmp.eq.s32.totalorder %s18, 1
      %p116 = por %p114, %p115
      %p118 = scmp.ne.s32.totalorder %s101, %s117
      %p119 = scmp.eq.s32.totalorder %s18, 0
      %p120 = por %p118, %p119
      %s121 = ssub.s32 %s19, %s38
      %s122 = ssub.s32 %s20, %s34
      %s123 = sor.u32 %s121, %s122
      %s124 = ssub.s32 %s21, %s30
      %s125 = sor.u32 %s123, %s124
      %p126 = scmp.eq.s32.totalorder %s125, 0
      %s128 = sadd.s32 %s127, 1
      %s129 = scalar_select %p126, %s127, %s128
      %p132 = pneg %p126
      %p133 = scmp.eq.s32.totalorder %s12, 1
      %p134 = por %p132, %p133
      %p135 = scmp.ne.s32.totalorder %s127, %s130
      %p136 = scmp.eq.s32.totalorder %s12, 0
      %p137 = por %p135, %p136
      %p138 = scmp.ne.s32.totalorder %s127, %s130
      %p139 = scmp.eq.s32.totalorder %s17, 1
      %p140 = por %p138, %p139
      %p141 = scmp.ne.s32.totalorder %s130, %s131
      %p142 = scmp.eq.s32.totalorder %s17, 0
      %p143 = por %p141, %p142
      %p144 = scmp.ne.s32.totalorder %s130, %s131
      %p145 = scmp.eq.s32.totalorder %s18, 1
      %p146 = por %p144, %p145
      %p148 = scmp.ne.s32.totalorder %s131, %s147
      %p149 = scmp.eq.s32.totalorder %s18, 0
      %p150 = por %p148, %p149
      %p151 = scmp.le.s32.totalorder 1, %s12
      %p152 = scmp.lt.s32.totalorder %s12, 3
      %p153 = pnand %p151, %p152
      %p154 = pneg %p153
      // Predicated region
      $region9: #{nystrom_attention_pallas.3} parent=5 // pred_check
        _
      $region10: #{nystrom_attention_pallas.3} parent=5 // pred_check_branch
        %156 = sbr.rel (%p153) target = $region12
      $region11: #{nystrom_attention_pallas.3} parent=5 // pred_region
        %s157 = ssub.s32 %s12, 1
        // Predicated region
        $region13: #{nystrom_attention_pallas.3} parent=11 // pred_check
          %p158 = pneg %p85
        $region14: #{nystrom_attention_pallas.3} parent=11 // pred_check_branch
          %160 = sbr.rel (%p158) target = $region16
        $region15: #{nystrom_attention_pallas.3} parent=11 // pred_region
          %p161 = scmp.lt.s32.totalorder %s22, 1
          %s162 = scalar_select %p161, %s22, 1
          %s163 = smul.addr %s162, 8
          %s164 = scalar_lea.vmem %s1, %s163
        $region16: #{nystrom_attention_pallas.3} parent=11 // pred_fallthru
          _
        // Predicated region
        $region17: #{nystrom_attention_pallas.3} parent=11 // pred_check
          %p165 = pneg %p113
        $region18: #{nystrom_attention_pallas.3} parent=11 // pred_check_branch
          %167 = sbr.rel (%p165) target = $region20
        $region19: #{nystrom_attention_pallas.3} parent=11 // pred_region
          %p168 = scmp.lt.s32.totalorder %s22, 1
          %s169 = scalar_select %p168, %s22, 1
          %p170 = scmp.lt.s32.totalorder %s24, 0
          %s171 = scalar_select %p170, %s24, 0
          %s172 = sadd.s32 %s171, %s169
          %s173 = smul.addr %s172, 8
          %s174 = scalar_lea.vmem %s2, %s173
        $region20: #{nystrom_attention_pallas.3} parent=11 // pred_fallthru
          _
      $region12: #{nystrom_attention_pallas.3} parent=5 // pred_fallthru
        _
      %p175 = scmp.lt.s32.totalorder %s12, 2
      // Predicated region
      $region21: #{nystrom_attention_pallas.3} parent=5 // pred_check
        %p176 = pneg %p175
      $region22: #{nystrom_attention_pallas.3} parent=5 // pred_check_branch
        %178 = sbr.rel (%p176) target = $region24
      $region23: #{nystrom_attention_pallas.3} parent=5 // pred_region
        // Predicated region
        $region25: #{nystrom_attention_pallas.3} parent=23 // pred_check
          %p179 = pneg %p53
        $region26: #{nystrom_attention_pallas.3} parent=23 // pred_check_branch
          %181 = sbr.rel (%p179) target = $region28
        $region27: #{nystrom_attention_pallas.3} parent=23 // pred_region
          %p182 = scmp.lt.s32.totalorder %s19, 1
          %s183 = scalar_select %p182, %s19, 1
          %p184 = scmp.lt.s32.totalorder %s20, 0
          %s185 = scalar_select %p184, %s20, 0
          %s186 = sadd.s32 %s185, %s183
          %s187 = smul.addr %s186, 8
          %s188 = scalar_lea.vmem %s0, %s187
        $region28: #{nystrom_attention_pallas.3} parent=23 // pred_fallthru
          _
      $region24: #{nystrom_attention_pallas.3} parent=5 // pred_fallthru
        _
      %p189 = scmp.le.s32.totalorder 1, %s12
      %p190 = scmp.lt.s32.totalorder %s12, 3
      %p191 = pnand %p189, %p190
      %p192 = pneg %p191
      // Predicated region
      $region29: #{nystrom_attention_pallas.3} parent=5 // pred_check
        _
      $region30: #{nystrom_attention_pallas.3} parent=5 // pred_check_branch
        %194 = sbr.rel (%p191) target = $region32
      $region31: #{nystrom_attention_pallas.3} parent=5 // pred_region
        %s195 = ssub.s32 %s12, 1
        %p196 = scmp.lt.s32.totalorder %s22, 1
        %s197 = scalar_select %p196, %s22, 1
        %p198 = scmp.lt.s32.totalorder %s23, 0
        %s199 = scalar_select %p198, %s23, 0
        %s200 = sadd.s32 %s199, %s197
        %s201 = smul.addr %s200, 8
        %s202 = scalar_lea.vmem %s0, %s201
        %p203 = pneg %p59
        %p204 = pneg %p56
        %p205 = scmp.lt.s32.totalorder %s22, 1
        %s206 = scalar_select %p205, %s22, 1
        %s207 = smul.addr %s206, 8
        %s208 = scalar_lea.vmem %s1, %s207
        %p209 = pneg %p85
        %p210 = pneg %p82
        %p211 = scmp.lt.s32.totalorder %s22, 1
        %s212 = scalar_select %p211, %s22, 1
        %p213 = scmp.lt.s32.totalorder %s24, 0
        %s214 = scalar_select %p213, %s24, 0
        %s215 = sadd.s32 %s214, %s212
        %s216 = smul.addr %s215, 8
        %s217 = scalar_lea.vmem %s2, %s216
        %p218 = pneg %p113
        %p219 = pneg %p110
        %p220 = pneg %p143
        %p221 = pneg %p140
        %s222 = sand.u32 %s130, 1
        %s223 = scalar_lea.sflag [#allocation3], %s222
        %s224 = sand.u32 %s130, 1
        %s225 = smul.addr %s224, 64
        %s226 = scalar_lea.vmem [#allocation2], %s225
        %p227 = scmp.lt.s32.totalorder %s22, 1
        %s228 = scalar_select %p227, %s22, 1
        %p229 = scmp.lt.s32.totalorder %s23, 0
        %s230 = scalar_select %p229, %s23, 0
        %s231 = sadd.s32 %s230, %s228
        %s232 = smul.addr %s231, 8
        %s233 = scalar_lea.vmem %s0, %s232
        %p234 = scmp.lt.s32.totalorder %s22, 1
        %s235 = scalar_select %p234, %s22, 1
        %s236 = smul.addr %s235, 8
        %s237 = scalar_lea.vmem %s1, %s236
        %p238 = scmp.lt.s32.totalorder %s22, 1
        %s239 = scalar_select %p238, %s22, 1
        %p240 = scmp.lt.s32.totalorder %s24, 0
        %s241 = scalar_select %p240, %s24, 0
        %s242 = sadd.s32 %s241, %s239
        %s243 = smul.addr %s242, 8
        %s244 = scalar_lea.vmem %s2, %s243
        %s245 = smul.u32 8, %s23
        %v246 = vld [vmem:[%s233] sm:$0xff]
        %v247 = vld [vmem:[%s237] sm:$0xff]
        %248 = vxpose.xlu0.b32.start [1/16] %v246, 128
        %249 = vxpose.xlu0.b32.cont [2/16] 0.0, 128
        %250 = vxpose.xlu0.b32.cont [3/16] 0.0, 128
        %251 = vxpose.xlu0.b32.cont [4/16] 0.0, 128
        %252 = vxpose.xlu0.b32.cont [5/16] 0.0, 128
        %253 = vxpose.xlu0.b32.cont [6/16] 0.0, 128
        %254 = vxpose.xlu0.b32.cont [7/16] 0.0, 128
        %255 = vxpose.xlu0.b32.cont [8/16] 0.0, 128
        %256 = vxpose.xlu0.b32.cont [9/16] 0.0, 128
        %257 = vxpose.xlu0.b32.cont [10/16] 0.0, 128
        %258 = vxpose.xlu0.b32.cont [11/16] 0.0, 128
        %259 = vxpose.xlu0.b32.cont [12/16] 0.0, 128
        %260 = vxpose.xlu0.b32.cont [13/16] 0.0, 128
        %261 = vxpose.xlu0.b32.cont [14/16] 0.0, 128
        %262 = vxpose.xlu0.b32.cont [15/16] 0.0, 128
        %263 = vxpose.xlu0.b32.end [16/16] 0.0, 128
        %v264 = vpop.trf.xlu0
        %v265 = vpop.trf.xlu0
        %v266 = vpop.trf.xlu0
        %v267 = vpop.trf.xlu0
        %v268 = vpop.trf.xlu0
        %v269 = vpop.trf.xlu0
        %v270 = vpop.trf.xlu0
        %v271 = vpop.trf.xlu0
        %v272 = vpop.trf.xlu0
        %v273 = vpop.trf.xlu0
        %v274 = vpop.trf.xlu0
        %v275 = vpop.trf.xlu0
        %v276 = vpop.trf.xlu0
        %v277 = vpop.trf.xlu0
        %v278 = vpop.trf.xlu0
        %v279 = vpop.trf.xlu0
        %vm280 = vcmask 64512
        %v282 = vsel %vm280, %v264, 0
        %v285 = vsel %vm280, %v265, 0
        %v288 = vsel %vm280, %v266, 0
        %v291 = vsel %vm280, %v267, 0
        %v294 = vsel %vm280, %v268, 0
        %v297 = vsel %vm280, %v269, 0
        %v300 = vsel %vm280, %v270, 0
        %v303 = vsel %vm280, %v271, 0
        %305 = vmatprep.subr.mxu0 0.0
        %306 = vmatpush1.msra.mxu0 %v247
        %307 = vmatprep.subr.mxu0 0.0
        %308 = vmatpush1.msra.mxu0 0.0
        %309 = vmatprep.subr.mxu0 0.0
        %310 = vmatpush1.msra.mxu0 0.0
        %311 = vmatprep.subr.mxu0 0.0
        %312 = vmatpush1.msra.mxu0 0.0
        %313 = vmatprep.subr.mxu0 0.0
        %314 = vmatpush1.msra.mxu0 0.0
        %315 = vmatprep.subr.mxu0 0.0
        %316 = vmatpush1.msra.mxu0 0.0
        %317 = vmatprep.subr.mxu0 0.0
        %318 = vmatpush1.msra.mxu0 0.0
        %319 = vmatprep.subr.mxu0 0.0
        %320 = vmatpush1.msra.mxu0 0.0
        %321 = vmatprep.subr.mxu0 0.0
        %322 = vmatpush1.msra.mxu0 0.0
        %323 = vmatprep.subr.mxu0 0.0
        %324 = vmatpush1.msra.mxu0 0.0
        %325 = vmatprep.subr.mxu0 0.0
        %326 = vmatpush1.msra.mxu0 0.0
        %327 = vmatprep.subr.mxu0 0.0
        %328 = vmatpush1.msra.mxu0 0.0
        %329 = vmatprep.subr.mxu0 0.0
        %330 = vmatpush1.msra.mxu0 0.0
        %331 = vmatprep.subr.mxu0 0.0
        %332 = vmatpush1.msra.mxu0 0.0
        %333 = vmatprep.subr.mxu0 0.0
        %334 = vmatpush1.msra.mxu0 0.0
        %335 = vmatprep.subr.mxu0 0.0
        %336 = vmatpush1.msra.mxu0 0.0
        %337 = vmatprep.subr.mxu0 0.0
        %338 = vmatpush1.msra.mxu0 0.0
        %339 = vmatprep.subr.mxu0 0.0
        %340 = vmatpush1.msra.mxu0 0.0
        %341 = vmatprep.subr.mxu0 0.0
        %342 = vmatpush1.msra.mxu0 0.0
        %343 = vmatprep.subr.mxu0 0.0
        %344 = vmatpush1.msra.mxu0 0.0
        %345 = vmatprep.subr.mxu0 0.0
        %346 = vmatpush1.msra.mxu0 0.0
        %347 = vmatprep.subr.mxu0 0.0
        %348 = vmatpush1.msra.mxu0 0.0
        %349 = vmatprep.subr.mxu0 0.0
        %350 = vmatpush1.msra.mxu0 0.0
        %351 = vmatprep.subr.mxu0 0.0
        %352 = vmatpush1.msra.mxu0 0.0
        %353 = vmatprep.subr.mxu0 0.0
        %354 = vmatpush1.msra.mxu0 0.0
        %355 = vmatprep.subr.mxu0 0.0
        %356 = vmatpush1.msra.mxu0 0.0
        %357 = vmatprep.subr.mxu0 0.0
        %358 = vmatpush1.msra.mxu0 0.0
        %359 = vmatprep.subr.mxu0 0.0
        %360 = vmatpush1.msra.mxu0 0.0
        %361 = vmatprep.subr.mxu0 0.0
        %362 = vmatpush1.msra.mxu0 0.0
        %363 = vmatprep.subr.mxu0 0.0
        %364 = vmatpush1.msra.mxu0 0.0
        %365 = vmatprep.subr.mxu0 0.0
        %366 = vmatpush1.msra.mxu0 0.0
        %367 = vmatprep.subr.mxu0 0.0
        %368 = vmatpush1.msra.mxu0 0.0
        %369 = vmatprep.mubr.f32.mxu0 0.0
        %370 = vmatmul.mubr.f32.gmra.mrb[0].mxu0 %v282
        %v371 = vpop.f32.mrb[0].mxu0
        %v372 = vadd.f32 0.0, %v371
        %v373 = vpop.f32.mrb[0].mxu0
        %374 = vmatprep.mubr.f32.mxu0 0.0
        %375 = vmatmul.mubr.f32.gmra.mrb[0].mxu0 %v285
        %v376 = vpop.f32.mrb[0].mxu0
        %v377 = vadd.f32 0.0, %v376
        %v378 = vpop.f32.mrb[0].mxu0
        %379 = vmatprep.mubr.f32.mxu0 0.0
        %380 = vmatmul.mubr.f32.gmra.mrb[0].mxu0 %v288
        %v381 = vpop.f32.mrb[0].mxu0
        %v382 = vadd.f32 0.0, %v381
        %v383 = vpop.f32.mrb[0].mxu0
        %384 = vmatprep.mubr.f32.mxu0 0.0
        %385 = vmatmul.mubr.f32.gmra.mrb[0].mxu0 %v291
        %v386 = vpop.f32.mrb[0].mxu0
        %v387 = vadd.f32 0.0, %v386
        %v388 = vpop.f32.mrb[0].mxu0
        %389 = vmatprep.mubr.f32.mxu0 0.0
        %390 = vmatmul.mubr.f32.gmra.mrb[0].mxu0 %v294
        %v391 = vpop.f32.mrb[0].mxu0
        %v392 = vadd.f32 0.0, %v391
        %v393 = vpop.f32.mrb[0].mxu0
        %394 = vmatprep.mubr.f32.mxu0 0.0
        %395 = vmatmul.mubr.f32.gmra.mrb[0].mxu0 %v297
        %v396 = vpop.f32.mrb[0].mxu0
        %v397 = vadd.f32 0.0, %v396
        %v398 = vpop.f32.mrb[0].mxu0
        %399 = vmatprep.mubr.f32.mxu0 0.0
        %400 = vmatmul.mubr.f32.gmra.mrb[0].mxu0 %v300
        %v401 = vpop.f32.mrb[0].mxu0
        %v402 = vadd.f32 0.0, %v401
        %v403 = vpop.f32.mrb[0].mxu0
        %404 = vmatprep.mubr.f32.mxu0 0.0
        %405 = vmatmul.mubr.f32.gmra.mrb[0].mxu0 %v303
        %v406 = vpop.f32.mrb[0].mxu0
        %v407 = vadd.f32 0.0, %v406
        %v408 = vpop.f32.mrb[0].mxu0
        %409 = vdwg.mxu0
        %v410 = vld [vmem:[%s244] sm:$0xff]
        %v412 = vsel %vm280, %v372, 0
        %v415 = vsel %vm280, %v377, 0
        %v418 = vsel %vm280, %v382, 0
        %v421 = vsel %vm280, %v387, 0
        %v424 = vsel %vm280, %v392, 0
        %v427 = vsel %vm280, %v397, 0
        %v430 = vsel %vm280, %v402, 0
        %v433 = vsel %vm280, %v407, 0
        %435 = vmatprep.subr.mxu0 0.0
        %436 = vmatpush1.msra.mxu0 %v410
        %437 = vmatprep.subr.mxu0 0.0
        %438 = vmatpush1.msra.mxu0 0.0
        %439 = vmatprep.subr.mxu0 0.0
        %440 = vmatpush1.msra.mxu0 0.0
        %441 = vmatprep.subr.mxu0 0.0
        %442 = vmatpush1.msra.mxu0 0.0
        %443 = vmatprep.subr.mxu0 0.0
        %444 = vmatpush1.msra.mxu0 0.0
        %445 = vmatprep.subr.mxu0 0.0
        %446 = vmatpush1.msra.mxu0 0.0
        %447 = vmatprep.subr.mxu0 0.0
        %448 = vmatpush1.msra.mxu0 0.0
        %449 = vmatprep.subr.mxu0 0.0
        %450 = vmatpush1.msra.mxu0 0.0
        %451 = vmatprep.subr.mxu0 0.0
        %452 = vmatpush1.msra.mxu0 0.0
        %453 = vmatprep.subr.mxu0 0.0
        %454 = vmatpush1.msra.mxu0 0.0
        %455 = vmatprep.subr.mxu0 0.0
        %456 = vmatpush1.msra.mxu0 0.0
        %457 = vmatprep.subr.mxu0 0.0
        %458 = vmatpush1.msra.mxu0 0.0
        %459 = vmatprep.subr.mxu0 0.0
        %460 = vmatpush1.msra.mxu0 0.0
        %461 = vmatprep.subr.mxu0 0.0
        %462 = vmatpush1.msra.mxu0 0.0
        %463 = vmatprep.subr.mxu0 0.0
        %464 = vmatpush1.msra.mxu0 0.0
        %465 = vmatprep.subr.mxu0 0.0
        %466 = vmatpush1.msra.mxu0 0.0
        %467 = vmatprep.subr.mxu0 0.0
        %468 = vmatpush1.msra.mxu0 0.0
        %469 = vmatprep.subr.mxu0 0.0
        %470 = vmatpush1.msra.mxu0 0.0
        %471 = vmatprep.subr.mxu0 0.0
        %472 = vmatpush1.msra.mxu0 0.0
        %473 = vmatprep.subr.mxu0 0.0
        %474 = vmatpush1.msra.mxu0 0.0
        %475 = vmatprep.subr.mxu0 0.0
        %476 = vmatpush1.msra.mxu0 0.0
        %477 = vmatprep.subr.mxu0 0.0
        %478 = vmatpush1.msra.mxu0 0.0
        %479 = vmatprep.subr.mxu0 0.0
        %480 = vmatpush1.msra.mxu0 0.0
        %481 = vmatprep.subr.mxu0 0.0
        %482 = vmatpush1.msra.mxu0 0.0
        %483 = vmatprep.subr.mxu0 0.0
        %484 = vmatpush1.msra.mxu0 0.0
        %485 = vmatprep.subr.mxu0 0.0
        %486 = vmatpush1.msra.mxu0 0.0
        %487 = vmatprep.subr.mxu0 0.0
        %488 = vmatpush1.msra.mxu0 0.0
        %489 = vmatprep.subr.mxu0 0.0
        %490 = vmatpush1.msra.mxu0 0.0
        %491 = vmatprep.subr.mxu0 0.0
        %492 = vmatpush1.msra.mxu0 0.0
        %493 = vmatprep.subr.mxu0 0.0
        %494 = vmatpush1.msra.mxu0 0.0
        %495 = vmatprep.subr.mxu0 0.0
        %496 = vmatpush1.msra.mxu0 0.0
        %497 = vmatprep.subr.mxu0 0.0
        %498 = vmatpush1.msra.mxu0 0.0
        %499 = vmatprep.mubr.f32.mxu0 0.0
        %500 = vmatmul.mubr.f32.gmra.mrb[0].mxu0 %v412
        %v501 = vpop.f32.mrb[0].mxu0
        %v502 = vadd.f32 0.0, %v501
        %v503 = vpop.f32.mrb[0].mxu0
        %504 = vmatprep.mubr.f32.mxu0 0.0
        %505 = vmatmul.mubr.f32.gmra.mrb[0].mxu0 %v415
        %v506 = vpop.f32.mrb[0].mxu0
        %v507 = vadd.f32 0.0, %v506
        %v508 = vpop.f32.mrb[0].mxu0
        %509 = vmatprep.mubr.f32.mxu0 0.0
        %510 = vmatmul.mubr.f32.gmra.mrb[0].mxu0 %v418
        %v511 = vpop.f32.mrb[0].mxu0
        %v512 = vadd.f32 0.0, %v511
        %v513 = vpop.f32.mrb[0].mxu0
        %514 = vmatprep.mubr.f32.mxu0 0.0
        %515 = vmatmul.mubr.f32.gmra.mrb[0].mxu0 %v421
        %v516 = vpop.f32.mrb[0].mxu0
        %v517 = vadd.f32 0.0, %v516
        %v518 = vpop.f32.mrb[0].mxu0
        %519 = vmatprep.mubr.f32.mxu0 0.0
        %520 = vmatmul.mubr.f32.gmra.mrb[0].mxu0 %v424
        %v521 = vpop.f32.mrb[0].mxu0
        %v522 = vadd.f32 0.0, %v521
        %v523 = vpop.f32.mrb[0].mxu0
        %524 = vmatprep.mubr.f32.mxu0 0.0
        %525 = vmatmul.mubr.f32.gmra.mrb[0].mxu0 %v427
        %v526 = vpop.f32.mrb[0].mxu0
        %v527 = vadd.f32 0.0, %v526
        %v528 = vpop.f32.mrb[0].mxu0
        %529 = vmatprep.mubr.f32.mxu0 0.0
        %530 = vmatmul.mubr.f32.gmra.mrb[0].mxu0 %v430
        %v531 = vpop.f32.mrb[0].mxu0
        %v532 = vadd.f32 0.0, %v531
        %v533 = vpop.f32.mrb[0].mxu0
        %534 = vmatprep.mubr.f32.mxu0 0.0
        %535 = vmatmul.mubr.f32.gmra.mrb[0].mxu0 %v433
        %v536 = vpop.f32.mrb[0].mxu0
        %v537 = vadd.f32 0.0, %v536
        %v538 = vpop.f32.mrb[0].mxu0
        %539 = vdwg.mxu0
        %vm540 = vcmask 523264
        %541 = vst.msk [vmem:[%s226] sm:$0xff] %vm540, %v502
        %542 = vst.msk [vmem:[%s226 + $0x8] sm:$0xff] %vm540, %v507
        %543 = vst.msk [vmem:[%s226 + $0x10] sm:$0xff] %vm540, %v512
        %544 = vst.msk [vmem:[%s226 + $0x18] sm:$0xff] %vm540, %v517
        %545 = vst.msk [vmem:[%s226 + $0x20] sm:$0xff] %vm540, %v522
        %546 = vst.msk [vmem:[%s226 + $0x28] sm:$0xff] %vm540, %v527
        %547 = vst.msk [vmem:[%s226 + $0x30] sm:$0xff] %vm540, %v532
        %548 = vst.msk [vmem:[%s226 + $0x38] sm:$0xff] %vm540, %v537
        %s549 = sand.u32 %s130, 1
        %s550 = scalar_lea.sflag [#allocation3], %s549
        %s551 = sand.u32 %s130, 1
        %s552 = smul.addr %s551, 64
        %s553 = scalar_lea.vmem [#allocation2], %s552
        // Predicated region
        $region33: #{nystrom_attention_pallas.3} parent=31 // pred_check
          %p554 = pneg %p140
        $region34: #{nystrom_attention_pallas.3} parent=31 // pred_check_branch
          %556 = sbr.rel (%p554) target = $region36
        $region35: #{nystrom_attention_pallas.3} parent=31 // pred_region
          %s557 = smul.u32 8, %s23
          %s559 = ssub.s32 1024, 1024
          %560 = vsyncadd %s550, %s559
          %s561 = sadd.s32 %s24, %s557
          %s562 = smul.addr %s22, 8
          %s563 = sadd.s32 %s561, %s562
          %s564 = smul.addr %s563, 128
          %s565 = scalar_lea.hbm %s3, %s564
          %s566 = sshll.u32 %s553, 4
          %s567 = int_to_ptr.vmem [resolvable:$true] %s566
          %572 = dma.vmem_to_hbm [thread:$0]  %s567, 1024, %s565, %s550, 128, 128, 8
        $region36: #{nystrom_attention_pallas.3} parent=31 // pred_fallthru
          _
      $region32: #{nystrom_attention_pallas.3} parent=5 // pred_fallthru
        _
      %p573 = scmp.le.s32.totalorder 2, %s12
      // Predicated region
      $region37: #{nystrom_attention_pallas.3} parent=5 // pred_check
        %p574 = pneg %p573
      $region38: #{nystrom_attention_pallas.3} parent=5 // pred_check_branch
        %576 = sbr.rel (%p574) target = $region40
      $region39: #{nystrom_attention_pallas.3} parent=5 // pred_region
        %s577 = ssub.s32 %s12, 2
        // Predicated region
        $region41: #{nystrom_attention_pallas.3} parent=39 // pred_check
          %p578 = pneg %p146
        $region42: #{nystrom_attention_pallas.3} parent=39 // pred_check_branch
          %580 = sbr.rel (%p578) target = $region44
        $region43: #{nystrom_attention_pallas.3} parent=39 // pred_region
          %s581 = sand.u32 %s131, 1
          %s582 = scalar_lea.sflag [#allocation3], %s581
          %s583 = sand.u32 %s131, 1
          %s584 = smul.addr %s583, 64
          %s585 = scalar_lea.vmem [#allocation2], %s584
          %586 = dma.done %s582, 1024
        $region44: #{nystrom_attention_pallas.3} parent=39 // pred_fallthru
          _
      $region40: #{nystrom_attention_pallas.3} parent=5 // pred_fallthru
        _
    $region6: #{nystrom_attention_pallas.3} parent=1 // loop_footer
      %s16 = sadd.s32 1, %s12
    $region7: #{nystrom_attention_pallas.3} parent=1 // loop_footer_branch
      %11 = sbr.rel target = $region3
    $region8: #{nystrom_attention_pallas.3} parent=1 // loop_exit
      _
    %587 = vsyncpa [#allocation3], 1
    %s588 = scalar_lea.sflag [#allocation3], 1
    %589 = vsyncpa %s588, 1

</llo_original>
